<compile_context>
chip_gen: v5e
topology: v5e:2x2
jax: 0.10.0
libtpu: 0.0.40
codegen_flags: <defaults>
</compile_context>

<pallas_src>
import functools

import jax
import jax.numpy as jnp
from jax.experimental import pallas as pl
from jax.experimental.pallas import tpu as pltpu


def _round_up(n: int, m: int) -> int:
    return ((n + m - 1) // m) * m


def _make_mlp_value_kernel(tanh_dtype):
    def kernel(x_ref, w1_ref, b1_ref, w2_ref, b2_ref, w3_ref, b3_ref, o_ref):
        # fc1: bf16 MXU operands, f32 accumulation; tanh in tanh_dtype
        # (bf16 on v6e/v7x to halve EUP pushes, f32 on v5e).
        x_bf16 = x_ref[...].astype(jnp.bfloat16)
        z1 = jnp.dot(x_bf16, w1_ref[...], preferred_element_type=jnp.float32) + b1_ref[...]
        h1 = jnp.tanh(z1.astype(tanh_dtype)).astype(jnp.bfloat16)

        # fc2: same pattern.
        z2 = jnp.dot(h1, w2_ref[...], preferred_element_type=jnp.float32) + b2_ref[...]
        h2 = jnp.tanh(z2.astype(tanh_dtype)).astype(jnp.bfloat16)

        # fc3 on the MXU: w3 is stored as a [Hp, 128] block with the real
        # column at index 0 and zeros elsewhere (avoids XLU lane-reduce chains
        # that share the vex slots with the fc1/fc2 matmul pushes).
        y = jnp.dot(h2, w3_ref[...], preferred_element_type=jnp.float32)  # [TB, 128]
        val = y[:, 0:1] + b3_ref[0]  # b3 is an SMEM scalar
        o_ref[...] = val.astype(o_ref.dtype)

    return kernel


def prepare_params(w1, b1, w2, b2, w3, b3):
    """One-time prep: pad hidden dim to lane width (128), cast weights to bf16.

    Zero-padding is exact: padded biases are 0, tanh(0)=0, and the padded
    rows/cols of w2/w3 are 0, so padded hidden units contribute nothing.
    Weights are stored [in, out] (transpose of PyTorch's [out, in]).
    """
    S, H = w1.shape
    Hp = _round_up(max(H, 128), 128)
    w1p = jnp.zeros((S, Hp), jnp.bfloat16).at[:, :H].set(w1.astype(jnp.bfloat16))
    b1p = jnp.zeros((1, Hp), jnp.float32).at[:, :H].set(b1.reshape(1, H).astype(jnp.float32))
    w2p = jnp.zeros((Hp, Hp), jnp.bfloat16).at[:H, :H].set(w2.astype(jnp.bfloat16))
    b2p = jnp.zeros((1, Hp), jnp.float32).at[:, :H].set(b2.reshape(1, H).astype(jnp.float32))
    # fc3 weights live in column 0 of a lane-wide [Hp, 128] block for the MXU.
    w3p = jnp.zeros((Hp, 128), jnp.bfloat16).at[:H, 0].set(w3.reshape(H).astype(jnp.bfloat16))
    b3s = b3.reshape(1).astype(jnp.float32)  # SMEM scalar
    return (w1p, b1p, w2p, b2p, w3p, b3s)


def baseline_network_forward(x, prepared_params, *, block_b: int = 8192,
                             tanh_dtype=jnp.bfloat16):
    """x: [B, state_space] f32; prepared_params from prepare_params(). Returns [B, 1] f32."""
    w1p, b1p, w2p, b2p, w3p, b3s = prepared_params
    B, S = x.shape
    Hp = w1p.shape[1]
    assert w1p.shape[0] == S

    # Batch tile: big enough to amortize per-grid-step overhead, but split at
    # least two ways (when B allows) so both v7x TensorCores get a tile.
    TB = min(block_b, max(8, _round_up(pl.cdiv(B, 2), 8)))
    grid = (pl.cdiv(B, TB),)  # ragged final tile: partial output block is masked

    out = pl.pallas_call(
        _make_mlp_value_kernel(tanh_dtype),
        out_shape=jax.ShapeDtypeStruct((B, 1), jnp.float32),
        grid=grid,
        in_specs=[
            pl.BlockSpec((TB, S), lambda i: (i, 0)),      # x: tiled over batch
            pl.BlockSpec((S, Hp), lambda i: (0, 0)),      # w1: VMEM-resident
            pl.BlockSpec((1, Hp), lambda i: (0, 0)),      # b1
            pl.BlockSpec((Hp, Hp), lambda i: (0, 0)),     # w2
            pl.BlockSpec((1, Hp), lambda i: (0, 0)),      # b2
            pl.BlockSpec((Hp, 128), lambda i: (0, 0)),    # w3 (col 0 real)
            pl.BlockSpec(memory_space=pltpu.MemorySpace.SMEM),  # b3 scalar
        ],
        out_specs=pl.BlockSpec((TB, 1), lambda i: (i, 0)),
        compiler_params=pltpu.CompilerParams(
            dimension_semantics=("parallel",),            # megacore/TC sharding
        ),
    )(x, w1p, b1p, w2p, b2p, w3p, b3s)
    return out


def init_params(key, state_space, hidden_size=64):
    # Mirrors torch.nn.init.normal_(weight) (std=1) and zeros_(bias).
    # Weights stored [in, out] (transpose of PyTorch's [out, in]).
    k1, k2, k3 = jax.random.split(key, 3)
    w1 = jax.random.normal(k1, (state_space, hidden_size), jnp.float32)
    b1 = jnp.zeros((1, hidden_size), jnp.float32)
    w2 = jax.random.normal(k2, (hidden_size, hidden_size), jnp.float32)
    b2 = jnp.zeros((1, hidden_size), jnp.float32)
    w3 = jax.random.normal(k3, (hidden_size, 1), jnp.float32)
    b3 = jnp.zeros((1, 1), jnp.float32)
    return w1, b1, w2, b2, w3, b3


if __name__ == "__main__":
    batch = 8
    state_space = 16
    hidden_size = 32

    key = jax.random.PRNGKey(0)
    kx, kp = jax.random.split(key)
    x = jax.random.normal(kx, (batch, state_space), jnp.float32)
    w1, b1, w2, b2, w3, b3 = init_params(kp, state_space, hidden_size)

    # One-time parameter prep (hoisted out of the per-call forward).
    prepared = prepare_params(w1, b1, w2, b2, w3, b3)

    # bf16 tanh on v6e/v7x (bf16-capable EUP); f32 elsewhere (v5e/v4 have none).
    try:
        kind = jax.devices()[0].device_kind.lower()
    except Exception:
        kind = ""
    tanh_dtype = jnp.bfloat16 if ("v6" in kind or "v7" in kind) else jnp.float32

    fwd = jax.jit(functools.partial(baseline_network_forward, tanh_dtype=tanh_dtype))
    value = jax.block_until_ready(fwd(x, prepared))
    assert value.shape == (batch, 1)

    # Reference 1: same bf16-operand / f32-accumulate / tanh_dtype pipeline as
    # the kernel (checks the kernel plumbing).
    xb = x.astype(jnp.bfloat16)
    z1 = jnp.dot(xb, w1.astype(jnp.bfloat16), preferred_element_type=jnp.float32) + b1
    h1r = jnp.tanh(z1.astype(tanh_dtype)).astype(jnp.bfloat16)
    z2 = jnp.dot(h1r, w2.astype(jnp.bfloat16), preferred_element_type=jnp.float32) + b2
    h2r = jnp.tanh(z2.astype(tanh_dtype)).astype(jnp.bfloat16)
    ref_matched = jnp.dot(h2r, w3.astype(jnp.bfloat16),
                          preferred_element_type=jnp.float32) + b3
    assert jnp.allclose(value, ref_matched, atol=5e-2, rtol=5e-2)

    # Reference 2: pure-f32 module semantics (loose tolerance: bf16 MXU
    # operands / bf16 tanh intentionally relax agreement vs full f32).
    hf = jnp.tanh(x @ w1 + b1)
    hf = jnp.tanh(hf @ w2 + b2)
    ref_f32 = hf @ w3 + b3
    assert jnp.allclose(value, ref_f32, atol=0.6, rtol=0.1)

    print("KERNEL_OK")
</pallas_src>

<mosaic_0001>
module attributes {stable_mosaic.version = 11 : i64} {
  func.func @kernel(%arg0: i32, %arg1: memref<8x16xf32, #tpu.memory_space<vmem>>, %arg2: memref<16x128xbf16, #tpu.memory_space<vmem>>, %arg3: memref<1x128xf32, #tpu.memory_space<vmem>>, %arg4: memref<128x128xbf16, #tpu.memory_space<vmem>>, %arg5: memref<1x128xf32, #tpu.memory_space<vmem>>, %arg6: memref<128x128xbf16, #tpu.memory_space<vmem>>, %arg7: memref<1xf32, #tpu.memory_space<smem>>, %arg8: memref<8x1xf32, #tpu.memory_space<vmem>>) attributes {dimension_semantics = [#tpu.dimension_semantics<parallel>], iteration_bounds = array<i64: 1>, scalar_prefetch = 0 : i64, scratch_operands = 0 : i64, tpu.core_type = #tpu.core_type<tc>, window_params = [{transform_indices = @transform_0, window_bounds = array<i64: 8, 16>}, {pipeline_mode = #tpu.pipeline_mode<synchronous>, transform_indices = @transform_1, window_bounds = array<i64: 16, 128>}, {pipeline_mode = #tpu.pipeline_mode<synchronous>, transform_indices = @transform_2, window_bounds = array<i64: 1, 128>}, {pipeline_mode = #tpu.pipeline_mode<synchronous>, transform_indices = @transform_3, window_bounds = array<i64: 128, 128>}, {pipeline_mode = #tpu.pipeline_mode<synchronous>, transform_indices = @transform_4, window_bounds = array<i64: 1, 128>}, {pipeline_mode = #tpu.pipeline_mode<synchronous>, transform_indices = @transform_5, window_bounds = array<i64: 128, 128>}, {transform_indices = @transform_6, window_bounds = array<i64: 1>}, {transform_indices = @transform_7, window_bounds = array<i64: 8, 1>}]} {
    %c0 = arith.constant 0 : index
    %c0_0 = arith.constant 0 : index
    %0 = vector.load %arg1[%c0, %c0_0] : memref<8x16xf32, #tpu.memory_space<vmem>>, vector<8x16xf32>
    %1 = arith.truncf %0 : vector<8x16xf32> to vector<8x16xbf16>
    %c0_1 = arith.constant 0 : index
    %c0_2 = arith.constant 0 : index
    %2 = vector.load %arg2[%c0_1, %c0_2] : memref<16x128xbf16, #tpu.memory_space<vmem>>, vector<16x128xbf16>
    %cst = arith.constant dense<0.000000e+00> : vector<8x128xf32>
    %3 = tpu.matmul %1, %2, %cst {dimension_numbers = #tpu.dot_dimension_numbers<[1], [0], [0], [1], [0, 0, 1, 1], [], []>} : vector<8x16xbf16>, vector<16x128xbf16>, vector<8x128xf32> -> vector<8x128xf32>
    %c0_3 = arith.constant 0 : index
    %c0_4 = arith.constant 0 : index
    %4 = vector.load %arg3[%c0_3, %c0_4] : memref<1x128xf32, #tpu.memory_space<vmem>>, vector<1x128xf32>
    %5 = vector.broadcast %4 : vector<1x128xf32> to vector<8x128xf32>
    %6 = arith.addf %3, %5 : vector<8x128xf32>
    %7 = math.tanh %6 : vector<8x128xf32>
    %8 = arith.truncf %7 : vector<8x128xf32> to vector<8x128xbf16>
    %c0_5 = arith.constant 0 : index
    %c0_6 = arith.constant 0 : index
    %9 = vector.load %arg4[%c0_5, %c0_6] : memref<128x128xbf16, #tpu.memory_space<vmem>>, vector<128x128xbf16>
    %cst_7 = arith.constant dense<0.000000e+00> : vector<8x128xf32>
    %10 = tpu.matmul %8, %9, %cst_7 {dimension_numbers = #tpu.dot_dimension_numbers<[1], [0], [0], [1], [0, 0, 1, 1], [], []>} : vector<8x128xbf16>, vector<128x128xbf16>, vector<8x128xf32> -> vector<8x128xf32>
    %c0_8 = arith.constant 0 : index
    %c0_9 = arith.constant 0 : index
    %11 = vector.load %arg5[%c0_8, %c0_9] : memref<1x128xf32, #tpu.memory_space<vmem>>, vector<1x128xf32>
    %12 = vector.broadcast %11 : vector<1x128xf32> to vector<8x128xf32>
    %13 = arith.addf %10, %12 : vector<8x128xf32>
    %14 = math.tanh %13 : vector<8x128xf32>
    %15 = arith.truncf %14 : vector<8x128xf32> to vector<8x128xbf16>
    %c0_10 = arith.constant 0 : index
    %c0_11 = arith.constant 0 : index
    %16 = vector.load %arg6[%c0_10, %c0_11] : memref<128x128xbf16, #tpu.memory_space<vmem>>, vector<128x128xbf16>
    %cst_12 = arith.constant dense<0.000000e+00> : vector<8x128xf32>
    %17 = tpu.matmul %15, %16, %cst_12 {dimension_numbers = #tpu.dot_dimension_numbers<[1], [0], [0], [1], [0, 0, 1, 1], [], []>} : vector<8x128xbf16>, vector<128x128xbf16>, vector<8x128xf32> -> vector<8x128xf32>
    %18 = vector.extract_strided_slice %17 {offsets = [0, 0], sizes = [8, 1], strides = [1, 1]} : vector<8x128xf32> to vector<8x1xf32>
    %c0_13 = arith.constant 0 : index
    %19 = memref.load %arg7[%c0_13] : memref<1xf32, #tpu.memory_space<smem>>
    %20 = vector.broadcast %19 : f32 to vector<8x1xf32>
    %21 = arith.addf %18, %20 : vector<8x1xf32>
    %c0_14 = arith.constant 0 : index
    %c0_15 = arith.constant 0 : index
    %22 = vector.load %arg8[%c0_14, %c0_15] : memref<8x1xf32, #tpu.memory_space<vmem>>, vector<8x1xf32>
    tpu.vector_store %arg8[%c0_14, %c0_15], %21 {strides = array<i32>} : memref<8x1xf32, #tpu.memory_space<vmem>>, vector<8x1xf32>,
    return
  }
  func.func @transform_0(%arg0: i32) -> (i32, i32) {
    %c0_i32 = arith.constant 0 : i32
    %c0_i32_0 = arith.constant 0 : i32
    return %arg0, %c0_i32 : i32, i32
  }
  func.func @transform_1(%arg0: i32) -> (i32, i32) {
    %c0_i32 = arith.constant 0 : i32
    %c0_i32_0 = arith.constant 0 : i32
    %c0_i32_1 = arith.constant 0 : i32
    return %c0_i32, %c0_i32_0 : i32, i32
  }
  func.func @transform_2(%arg0: i32) -> (i32, i32) {
    %c0_i32 = arith.constant 0 : i32
    %c0_i32_0 = arith.constant 0 : i32
    %c0_i32_1 = arith.constant 0 : i32
    return %c0_i32, %c0_i32_0 : i32, i32
  }
  func.func @transform_3(%arg0: i32) -> (i32, i32) {
    %c0_i32 = arith.constant 0 : i32
    %c0_i32_0 = arith.constant 0 : i32
    %c0_i32_1 = arith.constant 0 : i32
    return %c0_i32, %c0_i32_0 : i32, i32
  }
  func.func @transform_4(%arg0: i32) -> (i32, i32) {
    %c0_i32 = arith.constant 0 : i32
    %c0_i32_0 = arith.constant 0 : i32
    %c0_i32_1 = arith.constant 0 : i32
    return %c0_i32, %c0_i32_0 : i32, i32
  }
  func.func @transform_5(%arg0: i32) -> (i32, i32) {
    %c0_i32 = arith.constant 0 : i32
    %c0_i32_0 = arith.constant 0 : i32
    %c0_i32_1 = arith.constant 0 : i32
    return %c0_i32, %c0_i32_0 : i32, i32
  }
  func.func @transform_6(%arg0: i32) -> i32 {
    %c0_i32 = arith.constant 0 : i32
    %c0_i32_0 = arith.constant 0 : i32
    return %c0_i32 : i32
  }
  func.func @transform_7(%arg0: i32) -> (i32, i32) {
    %c0_i32 = arith.constant 0 : i32
    %c0_i32_0 = arith.constant 0 : i32
    return %arg0, %c0_i32 : i32, i32
  }
}

</mosaic_0001>

<llo_original>
// kernel: baseline_network_forward.1
$region0: #{baseline_network_forward.1}
  #allocation0 [shape = 'u32[]', space=smem, size = 0x4, offset = 0x4, fixed_abs, tag = 'smem constant byte address 0x4 - core index']
  #allocation1 [shape = 'u32[72,128]{1,0:T(1,128)}', space=vmem, size = 0x9000, scoped, tag = 'internal scratch']
  #allocation2 [shape = 'f32[1]{0:T(128)S(6)}', space=smem, size = 0x200, scoped, tag = 'scoped memory for baseline_network_forward.1']
  %s0 = inlined_call_operand.hbm [shape: f32[8,16], index: 0, kind: input, shape index: {}]
  %s1 = inlined_call_operand.hbm [shape: bf16[16,128], index: 1, kind: input, shape index: {}]
  %s2 = inlined_call_operand.vmem [shape: f32[1,128], index: 2, kind: input, shape index: {}]
  %s3 = inlined_call_operand.hbm [shape: bf16[128,128], index: 3, kind: input, shape index: {}]
  %s4 = inlined_call_operand.vmem [shape: f32[1,128], index: 4, kind: input, shape index: {}]
  %s5 = inlined_call_operand.hbm [shape: bf16[128,128], index: 5, kind: input, shape index: {}]
  %s6 = inlined_call_operand.<no memory space> [shape: f32[1], index: 6, kind: input, shape index: {}]
  %s7 = inlined_call_operand.vmem [shape: f32[8,1], index: 7, kind: output, shape index: {}]
  %s8 = sld [smem:[#allocation0]]
  $region54: #{baseline_network_forward.1} parent=0
    _
  %s10 = ssub.s32 1, %s8
  %s11 = scalar_select 0, %s10, %s8
  %12 = sst [smem:[#allocation2]] %s6
  $region1: #{baseline_network_forward.1} parent=0
    #allocation3 [shape = 'u8[4096]{0}', space=vmem, size = 0x1000, scoped, tag = 'input window, operand 0, single buffered']
    #allocation4 [shape = 's32[1]{0}', space=sflag, size = 0x4, scoped, tag = 'scoped memory for baseline_network_forward.1']
    #allocation5 [shape = 'u8[4096]{0}', space=vmem, size = 0x1000, scoped, tag = 'input window, operand 1, single buffered']
    #allocation6 [shape = 's32[1]{0}', space=sflag, size = 0x4, scoped, tag = 'scoped memory for baseline_network_forward.1']
    #allocation7 [shape = 'u8[32768]{0}', space=vmem, size = 0x8000, scoped, tag = 'input window, operand 3, single buffered']
    #allocation8 [shape = 'u8[32768]{0}', space=vmem, size = 0x8000, scoped, tag = 'input window, operand 5, single buffered']
    #allocation9 [shape = 's32[1]{0}', space=sflag, size = 0x4, scoped, tag = 'scoped memory for baseline_network_forward.1']
    %13 = vsyncpa [#allocation4], 0
    %14 = vsyncpa [#allocation6], 0
    %15 = vsyncpa [#allocation9], 0
    // Predicated region
    $region2: #{baseline_network_forward.1} parent=1 // pred_check
      _
    $region3: #{baseline_network_forward.1} parent=1 // pred_check_branch
      %17 = sbr.rel (0) target = $region5
    $region4: #{baseline_network_forward.1} parent=1 // pred_region
      %19 = vsyncadd [#allocation4], 0
      %s21 = sshll.u32 %s0, 4
      %s22 = int_to_ptr.hbm [resolvable:$true] %s21
      %s23 = sshll.u32 [#allocation3], 4
      %s24 = int_to_ptr.vmem [resolvable:$true] %s23
      %26 = dma.hbm_to_vmem [thread:$0]  %s22, 128, %s24, [#allocation4]
    $region5: #{baseline_network_forward.1} parent=1 // pred_fallthru
      _
    // Predicated region
    $region6: #{baseline_network_forward.1} parent=1 // pred_check
      _
    $region7: #{baseline_network_forward.1} parent=1 // pred_check_branch
      %28 = sbr.rel (0) target = $region9
    $region8: #{baseline_network_forward.1} parent=1 // pred_region
      %30 = vsyncadd [#allocation6], 0
      %s31 = sshll.u32 %s1, 4
      %s32 = int_to_ptr.hbm [resolvable:$true] %s31
      %s33 = sshll.u32 [#allocation5], 4
      %s34 = int_to_ptr.vmem [resolvable:$true] %s33
      %39 = dma.hbm_to_vmem [thread:$0]  %s32, 128, %s34, [#allocation6], 64, 64, 4
    $region9: #{baseline_network_forward.1} parent=1 // pred_fallthru
      _
    // Predicated region
    $region10: #{baseline_network_forward.1} parent=1 // pred_check
      _
    $region11: #{baseline_network_forward.1} parent=1 // pred_check_branch
      %41 = sbr.rel (0) target = $region13
    $region12: #{baseline_network_forward.1} parent=1 // pred_region
      _
    $region13: #{baseline_network_forward.1} parent=1 // pred_fallthru
      _
    // Predicated region
    $region14: #{baseline_network_forward.1} parent=1 // pred_check
      _
    $region15: #{baseline_network_forward.1} parent=1 // pred_check_branch
      %43 = sbr.rel (0) target = $region17
    $region16: #{baseline_network_forward.1} parent=1 // pred_region
      %45 = vsyncadd [#allocation6], 0
      %s46 = sshll.u32 %s3, 4
      %s47 = int_to_ptr.hbm [resolvable:$true] %s46
      %s48 = sshll.u32 [#allocation7], 4
      %s49 = int_to_ptr.vmem [resolvable:$true] %s48
      %54 = dma.hbm_to_vmem [thread:$0]  %s47, 1024, %s49, [#allocation6], 64, 64, 4
    $region17: #{baseline_network_forward.1} parent=1 // pred_fallthru
      _
    // Predicated region
    $region18: #{baseline_network_forward.1} parent=1 // pred_check
      _
    $region19: #{baseline_network_forward.1} parent=1 // pred_check_branch
      %56 = sbr.rel (0) target = $region21
    $region20: #{baseline_network_forward.1} parent=1 // pred_region
      _
    $region21: #{baseline_network_forward.1} parent=1 // pred_fallthru
      _
    // Predicated region
    $region22: #{baseline_network_forward.1} parent=1 // pred_check
      _
    $region23: #{baseline_network_forward.1} parent=1 // pred_check_branch
      %58 = sbr.rel (0) target = $region25
    $region24: #{baseline_network_forward.1} parent=1 // pred_region
      %60 = vsyncadd [#allocation9], 0
      %s61 = sshll.u32 %s5, 4
      %s62 = int_to_ptr.hbm [resolvable:$true] %s61
      %s63 = sshll.u32 [#allocation8], 4
      %s64 = int_to_ptr.vmem [resolvable:$true] %s63
      %69 = dma.hbm_to_vmem [thread:$0]  %s62, 1024, %s64, [#allocation9], 64, 64, 4
    $region25: #{baseline_network_forward.1} parent=1 // pred_fallthru
      _
    // Predicated region
    $region26: #{baseline_network_forward.1} parent=1 // pred_check
      _
    $region27: #{baseline_network_forward.1} parent=1 // pred_check_branch
      %71 = sbr.rel (0) target = $region29
    $region28: #{baseline_network_forward.1} parent=1 // pred_region
      _
    $region29: #{baseline_network_forward.1} parent=1 // pred_fallthru
      _
    // Predicated region
    $region30: #{baseline_network_forward.1} parent=1 // pred_check
      _
    $region31: #{baseline_network_forward.1} parent=1 // pred_check_branch
      %73 = sbr.rel (0) target = $region33
    $region32: #{baseline_network_forward.1} parent=1 // pred_region
      %75 = dma.done [#allocation4], 128
    $region33: #{baseline_network_forward.1} parent=1 // pred_fallthru
      _
    // Predicated region
    $region34: #{baseline_network_forward.1} parent=1 // pred_check
      _
    $region35: #{baseline_network_forward.1} parent=1 // pred_check_branch
      %77 = sbr.rel (0) target = $region37
    $region36: #{baseline_network_forward.1} parent=1 // pred_region
      %79 = dma.done [#allocation6], 128
    $region37: #{baseline_network_forward.1} parent=1 // pred_fallthru
      _
    // Predicated region
    $region38: #{baseline_network_forward.1} parent=1 // pred_check
      _
    $region39: #{baseline_network_forward.1} parent=1 // pred_check_branch
      %81 = sbr.rel (0) target = $region41
    $region40: #{baseline_network_forward.1} parent=1 // pred_region
      %83 = dma.done [#allocation6], 1024
    $region41: #{baseline_network_forward.1} parent=1 // pred_fallthru
      _
    // Predicated region
    $region42: #{baseline_network_forward.1} parent=1 // pred_check
      _
    $region43: #{baseline_network_forward.1} parent=1 // pred_check_branch
      %85 = sbr.rel (0) target = $region45
    $region44: #{baseline_network_forward.1} parent=1 // pred_region
      %87 = dma.done [#allocation9], 1024
    $region45: #{baseline_network_forward.1} parent=1 // pred_fallthru
      _
    %v89 = vld [vmem:[#allocation3] sm:$0xff]
    %v90 = vpack.c.bf16 %v89, %v89
    %v91 = vld [vmem:[#allocation5] sm:$0xf]
    %v92 = vld [vmem:[#allocation5 + $0x4] sm:$0xf]
    %v93 = vld [vmem:[%s2] sm:$0x1]
    %v95 = vperm.slane %v93, 0
    %v99 = vunpack.c.l.b16 %v91
    %v100 = vunpack.c.l.b16 %v92
    %v101 = vpack.c.b16 %v100, %v99
    %vm103 = vcmask 130048
    %v105 = vsel %vm103, %v90, 0
    %107 = vmatpush.bf16.msra.mxu0 0
    %108 = vmatpush.bf16.msra.mxu0 0
    %109 = vmatpush.bf16.msra.mxu0 0
    %110 = vmatpush.bf16.msra.mxu0 0
    %111 = vmatpush.bf16.msra.mxu0 0
    %112 = vmatpush.bf16.msra.mxu0 0
    %113 = vmatpush.bf16.msra.mxu0 0
    %114 = vmatpush.bf16.msra.mxu0 %v101
    %115 = vmatmul.bf16.gmra.mxu0 %v105
    %v116 = vpop.f32.mrf.mxu0
    %v117 = vadd.f32 %v95, %v116
    %v118 = vpop.f32.mrf.mxu0
    %119 = vdwg.mxu0
    %v120 = vtanh.pop %v117
    %v121 = vpack.c.bf16 %v120, %v120
    %v122 = vld [vmem:[#allocation7] sm:$0xf]
    %v123 = vld [vmem:[#allocation7 + $0x4] sm:$0xf]
    %v124 = vld [vmem:[#allocation7 + $0x8] sm:$0xf]
    %v125 = vld [vmem:[#allocation7 + $0xc] sm:$0xf]
    %v126 = vld [vmem:[#allocation7 + $0x10] sm:$0xf]
    %v127 = vld [vmem:[#allocation7 + $0x14] sm:$0xf]
    %v128 = vld [vmem:[#allocation7 + $0x18] sm:$0xf]
    %v129 = vld [vmem:[#allocation7 + $0x1c] sm:$0xf]
    %v130 = vld [vmem:[#allocation7 + $0x20] sm:$0xf]
    %v131 = vld [vmem:[#allocation7 + $0x24] sm:$0xf]
    %v132 = vld [vmem:[#allocation7 + $0x28] sm:$0xf]
    %v133 = vld [vmem:[#allocation7 + $0x2c] sm:$0xf]
    %v134 = vld [vmem:[#allocation7 + $0x30] sm:$0xf]
    %v135 = vld [vmem:[#allocation7 + $0x34] sm:$0xf]
    %v136 = vld [vmem:[#allocation7 + $0x38] sm:$0xf]
    %v137 = vld [vmem:[#allocation7 + $0x3c] sm:$0xf]
    %v138 = vld [vmem:[%s4] sm:$0x1]
    %v140 = vperm.slane %v138, 0
    %v158 = vunpack.c.l.b16 %v122
    %v159 = vunpack.c.l.b16 %v123
    %v160 = vunpack.c.l.b16 %v124
    %v161 = vunpack.c.l.b16 %v125
    %v162 = vunpack.c.l.b16 %v126
    %v163 = vunpack.c.l.b16 %v127
    %v164 = vunpack.c.l.b16 %v128
    %v165 = vunpack.c.l.b16 %v129
    %v166 = vunpack.c.l.b16 %v130
    %v167 = vunpack.c.l.b16 %v131
    %v168 = vunpack.c.l.b16 %v132
    %v169 = vunpack.c.l.b16 %v133
    %v170 = vunpack.c.l.b16 %v134
    %v171 = vunpack.c.l.b16 %v135
    %v172 = vunpack.c.l.b16 %v136
    %v173 = vunpack.c.l.b16 %v137
    %v174 = vpack.c.b16 %v159, %v158
    %v175 = vpack.c.b16 %v161, %v160
    %v176 = vpack.c.b16 %v163, %v162
    %v177 = vpack.c.b16 %v165, %v164
    %v178 = vpack.c.b16 %v167, %v166
    %v179 = vpack.c.b16 %v169, %v168
    %v180 = vpack.c.b16 %v171, %v170
    %v181 = vpack.c.b16 %v173, %v172
    %190 = vmatpush.bf16.msra.mxu0 %v181
    %191 = vmatpush.bf16.msra.mxu0 %v180
    %192 = vmatpush.bf16.msra.mxu0 %v179
    %193 = vmatpush.bf16.msra.mxu0 %v178
    %194 = vmatpush.bf16.msra.mxu0 %v177
    %195 = vmatpush.bf16.msra.mxu0 %v176
    %196 = vmatpush.bf16.msra.mxu0 %v175
    %197 = vmatpush.bf16.msra.mxu0 %v174
    %198 = vmatmul.bf16.gmra.mxu0 %v121
    %v199 = vpop.f32.mrf.mxu0
    %v200 = vadd.f32 %v140, %v199
    %v201 = vpop.f32.mrf.mxu0
    %202 = vdwg.mxu0
    %v203 = vtanh.pop %v200
    %v204 = vpack.c.bf16 %v203, %v203
    %v205 = vld [vmem:[#allocation8] sm:$0xf]
    %v206 = vld [vmem:[#allocation8 + $0x4] sm:$0xf]
    %v207 = vld [vmem:[#allocation8 + $0x8] sm:$0xf]
    %v208 = vld [vmem:[#allocation8 + $0xc] sm:$0xf]
    %v209 = vld [vmem:[#allocation8 + $0x10] sm:$0xf]
    %v210 = vld [vmem:[#allocation8 + $0x14] sm:$0xf]
    %v211 = vld [vmem:[#allocation8 + $0x18] sm:$0xf]
    %v212 = vld [vmem:[#allocation8 + $0x1c] sm:$0xf]
    %v213 = vld [vmem:[#allocation8 + $0x20] sm:$0xf]
    %v214 = vld [vmem:[#allocation8 + $0x24] sm:$0xf]
    %v215 = vld [vmem:[#allocation8 + $0x28] sm:$0xf]
    %v216 = vld [vmem:[#allocation8 + $0x2c] sm:$0xf]
    %v217 = vld [vmem:[#allocation8 + $0x30] sm:$0xf]
    %v218 = vld [vmem:[#allocation8 + $0x34] sm:$0xf]
    %v219 = vld [vmem:[#allocation8 + $0x38] sm:$0xf]
    %v220 = vld [vmem:[#allocation8 + $0x3c] sm:$0xf]
    %v237 = vunpack.c.l.b16 %v205
    %v238 = vunpack.c.l.b16 %v206
    %v239 = vunpack.c.l.b16 %v207
    %v240 = vunpack.c.l.b16 %v208
    %v241 = vunpack.c.l.b16 %v209
    %v242 = vunpack.c.l.b16 %v210
    %v243 = vunpack.c.l.b16 %v211
    %v244 = vunpack.c.l.b16 %v212
    %v245 = vunpack.c.l.b16 %v213
    %v246 = vunpack.c.l.b16 %v214
    %v247 = vunpack.c.l.b16 %v215
    %v248 = vunpack.c.l.b16 %v216
    %v249 = vunpack.c.l.b16 %v217
    %v250 = vunpack.c.l.b16 %v218
    %v251 = vunpack.c.l.b16 %v219
    %v252 = vunpack.c.l.b16 %v220
    %v253 = vpack.c.b16 %v238, %v237
    %v254 = vpack.c.b16 %v240, %v239
    %v255 = vpack.c.b16 %v242, %v241
    %v256 = vpack.c.b16 %v244, %v243
    %v257 = vpack.c.b16 %v246, %v245
    %v258 = vpack.c.b16 %v248, %v247
    %v259 = vpack.c.b16 %v250, %v249
    %v260 = vpack.c.b16 %v252, %v251
    %269 = vmatpush.bf16.msra.mxu0 %v260
    %270 = vmatpush.bf16.msra.mxu0 %v259
    %271 = vmatpush.bf16.msra.mxu0 %v258
    %272 = vmatpush.bf16.msra.mxu0 %v257
    %273 = vmatpush.bf16.msra.mxu0 %v256
    %274 = vmatpush.bf16.msra.mxu0 %v255
    %275 = vmatpush.bf16.msra.mxu0 %v254
    %276 = vmatpush.bf16.msra.mxu0 %v253
    %277 = vmatmul.bf16.gmra.mxu0 %v204
    %v278 = vpop.f32.mrf.mxu0
    %v279 = vadd.f32 0.0, %v278
    %v280 = vpop.f32.mrf.mxu0
    %281 = vdwg.mxu0
    %s282 = sld [smem:[#allocation2]]
    %v283 = vstv %s282
    %v284 = vadd.f32 %v279, %v283
    %vm285 = vcmask 7168
    %286 = vst.msk [vmem:[%s7] sm:$0xff] %vm285, %v284
    // Predicated region
    $region46: #{baseline_network_forward.1} parent=1 // pred_check
      _
    $region47: #{baseline_network_forward.1} parent=1 // pred_check_branch
      %288 = sbr.rel (0) target = $region49
    $region48: #{baseline_network_forward.1} parent=1 // pred_region
      _
    $region49: #{baseline_network_forward.1} parent=1 // pred_fallthru
      _
    // Predicated region
    $region50: #{baseline_network_forward.1} parent=1 // pred_check
      _
    $region51: #{baseline_network_forward.1} parent=1 // pred_check_branch
      %290 = sbr.rel (0) target = $region53
    $region52: #{baseline_network_forward.1} parent=1 // pred_region
      _
    $region53: #{baseline_network_forward.1} parent=1 // pred_fallthru
      _
    %291 = vsyncpa [#allocation4], 1
    %292 = vsyncpa [#allocation6], 1
    %293 = vsyncpa [#allocation9], 1

</llo_original>
